<compile_context>
chip_gen: v6e
topology: v6e:2x2x1
jax: 0.10.0
libtpu: 0.0.40
codegen_flags: <defaults>
</compile_context>

<pallas_src>
import functools

import jax
import jax.numpy as jnp
from jax.experimental import pallas as pl
from jax.experimental.pallas import tpu as pltpu


# ----------------------------------------------------------------------------
# Fast path: stride == 1 and 2*padding == k - 1  (output spatial == input).
# ----------------------------------------------------------------------------
def _same_conv_kernel(x_ref, w1_ref, b1_ref, w2_ref, b2_ref, mask_ref, out_ref,
                      xs_ref, col_ref, *, k, padding, W, L, SL, cin, cout):
    # x_ref   : (1, cin, L)       flat NCHW input block (L = H*W on lanes)
    # w1_ref  : (cin, K)          conv1 weights, K = k*k*cin, tap-major rows
    # b1_ref  : (cin, 1)
    # w2_ref  : (cout, K)
    # b2_ref  : (cout, 1)
    # mask_ref: (k, L)            horizontal-edge masks (one per kw offset)
    # out_ref : (1, cout, L)
    # xs_ref  : VMEM (cin, SL + L + SL)   flat image between zero slacks
    # col_ref : VMEM (K, L)               im2col matrix

    # Stage the flat image between two zero slacks. The slack absorbs taps that
    # fall vertically out of bounds; mask_ref zeroes the horizontal wrap-around.
    if SL > 0:
        zeros = jnp.zeros((cin, SL), jnp.float32)
        xs_ref[:, 0:SL] = zeros
        xs_ref[:, SL + L:SL + L + SL] = zeros
    xs_ref[:, SL:SL + L] = x_ref[0]

    mask_rows = [mask_ref[kw:kw + 1, :] for kw in range(k)]   # each (1, L)

    def build_col():
        for kh in range(k):
            for kw in range(k):
                tap = kh * k + kw
                start = SL + (kh - padding) * W + (kw - padding)
                patch = xs_ref[:, start:start + L]            # (cin, L)
                if kw != padding:                              # horizontal edge
                    patch = patch * mask_rows[kw]
                col_ref[tap * cin:(tap + 1) * cin, :] = patch

    # ---- conv1: single (cin, K) x (K, L) MXU matmul ----
    build_col()
    h1 = jnp.dot(w1_ref[...], col_ref[...],
                 preferred_element_type=jnp.float32) + b1_ref[...]
    h1 = jnp.where(h1 > 0, h1, 0.01 * h1)          # F.leaky_relu (slope 0.01)

    # ---- conv2: restage h1 (slacks are still zero) and repeat ----
    xs_ref[:, SL:SL + L] = h1
    build_col()
    out = jnp.dot(w2_ref[...], col_ref[...],
                  preferred_element_type=jnp.float32) + b2_ref[...]
    out_ref[0] = out                                # (cout, L), full-lane store


def _double_conv_same(x_nchw, w1, b1, w2, b2, *, padding):
    B, cin, H, W = x_nchw.shape
    cout = w2.shape[0]
    k = w1.shape[2]
    L = H * W
    K = k * k * cin
    S = padding * W + padding                        # max |flat tap shift|
    SL = ((S + 127) // 128) * 128 if S > 0 else 0    # 128-aligned slack width

    # Free row-major HBM reshape: NCHW -> (B, C, H*W) (lane-dense, no transpose).
    x_flat = x_nchw.reshape(B, cin, L).astype(jnp.float32)

    # OIHW -> (O, kh, kw, I) -> (O, K); matches im2col row r = (kh*k + kw)*cin + c.
    w1k = jnp.transpose(w1, (0, 2, 3, 1)).reshape(cin, K).astype(jnp.float32)
    w2k = jnp.transpose(w2, (0, 2, 3, 1)).reshape(cout, K).astype(jnp.float32)
    b1v = b1.reshape(cin, 1).astype(jnp.float32)
    b2v = b2.reshape(cout, 1).astype(jnp.float32)

    # Horizontal-edge masks depend only on the kw tap offset.
    col_idx = jnp.arange(L, dtype=jnp.int32) % W
    mask = jnp.stack(
        [((col_idx + (kw - padding) >= 0) & (col_idx + (kw - padding) < W))
         .astype(jnp.float32) for kw in range(k)], axis=0)      # (k, L)

    kernel = functools.partial(
        _same_conv_kernel, k=k, padding=padding, W=W, L=L, SL=SL,
        cin=cin, cout=cout)

    flops = 2 * B * K * L * (cin + cout)
    bytes_accessed = 4 * (B * cin * L + B * cout * L
                          + (cin + cout) * (K + 1) + k * L)

    out_flat = pl.pallas_call(
        kernel,
        out_shape=jax.ShapeDtypeStruct((B, cout, L), jnp.float32),
        grid=(B,),
        in_specs=[
            pl.BlockSpec((1, cin, L), lambda b: (b, 0, 0)),
            pl.BlockSpec((cin, K), lambda b: (0, 0)),
            pl.BlockSpec((cin, 1), lambda b: (0, 0)),
            pl.BlockSpec((cout, K), lambda b: (0, 0)),
            pl.BlockSpec((cout, 1), lambda b: (0, 0)),
            pl.BlockSpec((k, L), lambda b: (0, 0)),
        ],
        out_specs=pl.BlockSpec((1, cout, L), lambda b: (b, 0, 0)),
        scratch_shapes=[
            pltpu.VMEM((cin, SL + L + SL), jnp.float32),
            pltpu.VMEM((K, L), jnp.float32),
        ],
        compiler_params=pltpu.CompilerParams(
            dimension_semantics=("parallel",)),
        cost_estimate=pl.CostEstimate(
            flops=flops, transcendentals=0, bytes_accessed=bytes_accessed),
    )(x_flat, w1k, b1v, w2k, b2v, mask)

    # Free row-major reshape back to NCHW spatial dims.
    return out_flat.reshape(B, cout, H, W)


# ----------------------------------------------------------------------------
# General fallback (any stride / padding): per-tap matmuls, NHWC layout.
# TODO(synk): extend the lane-dense im2col fast path to strided / non-"same"
#             configurations (requires a general repitch of the flat layout).
# ----------------------------------------------------------------------------
def _general_kernel(x_ref, w1_ref, b1_ref, w2_ref, b2_ref, out_ref, h1_ref,
                    *, k, stride, padding, H1, W1, H2, W2, cin, cout):
    x = x_ref[0]                                   # (Hp, Wp, cin)
    acc1 = jnp.zeros((H1 * W1, cin), jnp.float32)
    for kh in range(k):
        for kw in range(k):
            patch = jax.lax.slice(
                x, (kh, kw, 0),
                (kh + stride * (H1 - 1) + 1, kw + stride * (W1 - 1) + 1, cin),
                (stride, stride, 1))
            acc1 += jnp.dot(patch.reshape(H1 * W1, cin), w1_ref[kh, kw],
                            preferred_element_type=jnp.float32)
    h1 = acc1 + b1_ref[...]
    h1 = jnp.where(h1 > 0, h1, 0.01 * h1)
    h1_ref[...] = jnp.zeros_like(h1_ref)
    h1_ref[padding:padding + H1, padding:padding + W1, :] = h1.reshape(H1, W1, cin)
    xp = h1_ref[...]
    acc2 = jnp.zeros((H2 * W2, cout), jnp.float32)
    for kh in range(k):
        for kw in range(k):
            patch = xp[kh:kh + H2, kw:kw + W2, :]
            acc2 += jnp.dot(patch.reshape(H2 * W2, cin), w2_ref[kh, kw],
                            preferred_element_type=jnp.float32)
    out_ref[0] = (acc2 + b2_ref[...]).reshape(H2, W2, cout)


def _double_conv_general(x_nchw, w1, b1, w2, b2, *, stride, padding):
    B, cin, H, W = x_nchw.shape
    cout = w2.shape[0]
    k = w1.shape[2]
    x = jnp.transpose(x_nchw, (0, 2, 3, 1)).astype(jnp.float32)
    xp = jnp.pad(x, ((0, 0), (padding, padding), (padding, padding), (0, 0)))
    Hp, Wp = H + 2 * padding, W + 2 * padding
    H1 = (Hp - k) // stride + 1
    W1 = (Wp - k) // stride + 1
    H2 = H1 + 2 * padding - k + 1
    W2 = W1 + 2 * padding - k + 1
    w1k = jnp.transpose(w1, (2, 3, 1, 0)).astype(jnp.float32)
    w2k = jnp.transpose(w2, (2, 3, 1, 0)).astype(jnp.float32)
    b1v = b1.reshape(1, cin).astype(jnp.float32)
    b2v = b2.reshape(1, cout).astype(jnp.float32)
    kernel = functools.partial(
        _general_kernel, k=k, stride=stride, padding=padding,
        H1=H1, W1=W1, H2=H2, W2=W2, cin=cin, cout=cout)
    out_nhwc = pl.pallas_call(
        kernel,
        out_shape=jax.ShapeDtypeStruct((B, H2, W2, cout), jnp.float32),
        grid=(B,),
        in_specs=[
            pl.BlockSpec((1, Hp, Wp, cin), lambda b: (b, 0, 0, 0)),
            pl.BlockSpec((k, k, cin, cin), lambda b: (0, 0, 0, 0)),
            pl.BlockSpec((1, cin), lambda b: (0, 0)),
            pl.BlockSpec((k, k, cin, cout), lambda b: (0, 0, 0, 0)),
            pl.BlockSpec((1, cout), lambda b: (0, 0)),
        ],
        out_specs=pl.BlockSpec((1, H2, W2, cout), lambda b: (b, 0, 0, 0)),
        scratch_shapes=[
            pltpu.VMEM((H1 + 2 * padding, W1 + 2 * padding, cin), jnp.float32)],
        compiler_params=pltpu.CompilerParams(dimension_semantics=("parallel",)),
    )(xp, w1k, b1v, w2k, b2v)
    return jnp.transpose(out_nhwc, (0, 3, 1, 2))


def double_conv(x_nchw, w1, b1, w2, b2, *, stride, padding):
    """DoubleConv forward.  w1: (cin, cin, k, k), w2: (cout, cin, k, k) OIHW."""
    k = w1.shape[2]
    if stride == 1 and 2 * padding == k - 1:
        return _double_conv_same(x_nchw, w1, b1, w2, b2, padding=padding)
    return _double_conv_general(x_nchw, w1, b1, w2, b2,
                                stride=stride, padding=padding)


def ref_double_conv(x, w1, b1, w2, b2, *, stride, padding):
    """Pure-JAX reference matching the PyTorch forward (NCHW)."""
    y = jax.lax.conv_general_dilated(
        x, w1, (stride, stride), [(padding, padding), (padding, padding)],
        dimension_numbers=("NCHW", "OIHW", "NCHW"))
    y = y + b1[None, :, None, None]
    y = jnp.where(y > 0, y, 0.01 * y)
    z = jax.lax.conv_general_dilated(
        y, w2, (1, 1), [(padding, padding), (padding, padding)],
        dimension_numbers=("NCHW", "OIHW", "NCHW"))
    return z + b2[None, :, None, None]


if __name__ == "__main__":
    # Module config: DoubleConv(cin=4, cout=8, k=3, stride=1, padding=1)
    B, cin, cout, H, W, k, stride, padding = 2, 4, 8, 16, 16, 3, 1, 1

    key = jax.random.PRNGKey(0)
    kx, k1, k2, kb1, kb2 = jax.random.split(key, 5)

    x = jax.random.normal(kx, (B, cin, H, W), jnp.float32)

    # Deterministic kaiming-uniform-like init for the conv weights (OIHW).
    fan_in = cin * k * k
    bound = (6.0 / fan_in) ** 0.5
    w1 = jax.random.uniform(k1, (cin, cin, k, k), jnp.float32, -bound, bound)
    w2 = jax.random.uniform(k2, (cout, cin, k, k), jnp.float32, -bound, bound)
    b1 = 0.1 * jax.random.normal(kb1, (cin,), jnp.float32)
    b2 = 0.1 * jax.random.normal(kb2, (cout,), jnp.float32)

    out = double_conv(x, w1, b1, w2, b2, stride=stride, padding=padding)
    out = jax.block_until_ready(out)

    ref = ref_double_conv(x, w1, b1, w2, b2, stride=stride, padding=padding)
    assert out.shape == ref.shape, (out.shape, ref.shape)
    assert jnp.allclose(out, ref, atol=1e-4, rtol=1e-4), "mismatch vs reference"

    print("KERNEL_OK")
</pallas_src>

<mosaic_0001>
module attributes {stable_mosaic.version = 11 : i64} {
  func.func @_same_conv_kernel(%arg0: i32, %arg1: memref<1x4x256xf32, #tpu.memory_space<vmem>>, %arg2: memref<4x36xf32, #tpu.memory_space<vmem>>, %arg3: memref<4x1xf32, #tpu.memory_space<vmem>>, %arg4: memref<8x36xf32, #tpu.memory_space<vmem>>, %arg5: memref<8x1xf32, #tpu.memory_space<vmem>>, %arg6: memref<3x256xf32, #tpu.memory_space<vmem>>, %arg7: memref<1x8x256xf32, #tpu.memory_space<vmem>>, %arg8: memref<4x512xf32, #tpu.memory_space<vmem>>, %arg9: memref<36x256xf32, #tpu.memory_space<vmem>>) attributes {dimension_semantics = [#tpu.dimension_semantics<parallel>], iteration_bounds = array<i64: 2>, scalar_prefetch = 0 : i64, scratch_operands = 2 : i64, tpu.core_type = #tpu.core_type<tc>, window_params = [{transform_indices = @transform_0, window_bounds = array<i64: 1, 4, 256>}, {pipeline_mode = #tpu.pipeline_mode<synchronous>, transform_indices = @transform_1, window_bounds = array<i64: 4, 36>}, {pipeline_mode = #tpu.pipeline_mode<synchronous>, transform_indices = @transform_2, window_bounds = array<i64: 4, 1>}, {pipeline_mode = #tpu.pipeline_mode<synchronous>, transform_indices = @transform_3, window_bounds = array<i64: 8, 36>}, {pipeline_mode = #tpu.pipeline_mode<synchronous>, transform_indices = @transform_4, window_bounds = array<i64: 8, 1>}, {pipeline_mode = #tpu.pipeline_mode<synchronous>, transform_indices = @transform_5, window_bounds = array<i64: 3, 256>}, {transform_indices = @transform_6, window_bounds = array<i64: 1, 8, 256>}]} {
    %cst = arith.constant 0.000000e+00 : f32
    %0 = vector.broadcast %cst : f32 to vector<4x128xf32>
    %c0 = arith.constant 0 : index
    %c0_0 = arith.constant 0 : index
    %1 = vector.load %arg8[%c0, %c0_0] : memref<4x512xf32, #tpu.memory_space<vmem>>, vector<4x128xf32>
    tpu.vector_store %arg8[%c0, %c0_0], %0 {strides = array<i32>} : memref<4x512xf32, #tpu.memory_space<vmem>>, vector<4x128xf32>,
    %c0_1 = arith.constant 0 : index
    %c384 = arith.constant 384 : index
    %2 = vector.load %arg8[%c0_1, %c384] : memref<4x512xf32, #tpu.memory_space<vmem>>, vector<4x128xf32>
    tpu.vector_store %arg8[%c0_1, %c384], %0 {strides = array<i32>} : memref<4x512xf32, #tpu.memory_space<vmem>>, vector<4x128xf32>,
    %c0_2 = arith.constant 0 : index
    %c0_3 = arith.constant 0 : index
    %c0_4 = arith.constant 0 : index
    %3 = vector.load %arg1[%c0_2, %c0_3, %c0_4] : memref<1x4x256xf32, #tpu.memory_space<vmem>>, vector<1x4x256xf32>
    %4 = vector.shape_cast %3 : vector<1x4x256xf32> to vector<4x256xf32>
    %c0_5 = arith.constant 0 : index
    %c128 = arith.constant 128 : index
    %5 = vector.load %arg8[%c0_5, %c128] : memref<4x512xf32, #tpu.memory_space<vmem>>, vector<4x256xf32>
    tpu.vector_store %arg8[%c0_5, %c128], %4 {strides = array<i32>} : memref<4x512xf32, #tpu.memory_space<vmem>>, vector<4x256xf32>,
    %c0_6 = arith.constant 0 : index
    %c0_7 = arith.constant 0 : index
    %6 = vector.load %arg6[%c0_6, %c0_7] : memref<3x256xf32, #tpu.memory_space<vmem>>, vector<1x256xf32>
    %c2 = arith.constant 2 : index
    %c0_8 = arith.constant 0 : index
    %7 = vector.load %arg6[%c2, %c0_8] : memref<3x256xf32, #tpu.memory_space<vmem>>, vector<1x256xf32>
    %c0_9 = arith.constant 0 : index
    %c111 = arith.constant 111 : index
    %8 = vector.load %arg8[%c0_9, %c111] : memref<4x512xf32, #tpu.memory_space<vmem>>, vector<4x256xf32>
    %9 = vector.broadcast %6 : vector<1x256xf32> to vector<4x256xf32>
    %10 = arith.mulf %8, %9 : vector<4x256xf32>
    %c0_10 = arith.constant 0 : index
    %c0_11 = arith.constant 0 : index
    %11 = vector.load %arg9[%c0_10, %c0_11] : memref<36x256xf32, #tpu.memory_space<vmem>>, vector<4x256xf32>
    tpu.vector_store %arg9[%c0_10, %c0_11], %10 {strides = array<i32>} : memref<36x256xf32, #tpu.memory_space<vmem>>, vector<4x256xf32>,
    %c0_12 = arith.constant 0 : index
    %c112 = arith.constant 112 : index
    %12 = vector.load %arg8[%c0_12, %c112] : memref<4x512xf32, #tpu.memory_space<vmem>>, vector<4x256xf32>
    %c4 = arith.constant 4 : index
    %c0_13 = arith.constant 0 : index
    %13 = vector.load %arg9[%c4, %c0_13] : memref<36x256xf32, #tpu.memory_space<vmem>>, vector<4x256xf32>
    tpu.vector_store %arg9[%c4, %c0_13], %12 {strides = array<i32>} : memref<36x256xf32, #tpu.memory_space<vmem>>, vector<4x256xf32>,
    %c0_14 = arith.constant 0 : index
    %c113 = arith.constant 113 : index
    %14 = vector.load %arg8[%c0_14, %c113] : memref<4x512xf32, #tpu.memory_space<vmem>>, vector<4x256xf32>
    %15 = vector.broadcast %7 : vector<1x256xf32> to vector<4x256xf32>
    %16 = arith.mulf %14, %15 : vector<4x256xf32>
    %c8 = arith.constant 8 : index
    %c0_15 = arith.constant 0 : index
    %17 = vector.load %arg9[%c8, %c0_15] : memref<36x256xf32, #tpu.memory_space<vmem>>, vector<4x256xf32>
    tpu.vector_store %arg9[%c8, %c0_15], %16 {strides = array<i32>} : memref<36x256xf32, #tpu.memory_space<vmem>>, vector<4x256xf32>,
    %c0_16 = arith.constant 0 : index
    %c127 = arith.constant 127 : index
    %18 = vector.load %arg8[%c0_16, %c127] : memref<4x512xf32, #tpu.memory_space<vmem>>, vector<4x256xf32>
    %19 = vector.broadcast %6 : vector<1x256xf32> to vector<4x256xf32>
    %20 = arith.mulf %18, %19 : vector<4x256xf32>
    %c12 = arith.constant 12 : index
    %c0_17 = arith.constant 0 : index
    %21 = vector.load %arg9[%c12, %c0_17] : memref<36x256xf32, #tpu.memory_space<vmem>>, vector<4x256xf32>
    tpu.vector_store %arg9[%c12, %c0_17], %20 {strides = array<i32>} : memref<36x256xf32, #tpu.memory_space<vmem>>, vector<4x256xf32>,
    %c0_18 = arith.constant 0 : index
    %c128_19 = arith.constant 128 : index
    %22 = vector.load %arg8[%c0_18, %c128_19] : memref<4x512xf32, #tpu.memory_space<vmem>>, vector<4x256xf32>
    %c16 = arith.constant 16 : index
    %c0_20 = arith.constant 0 : index
    %23 = vector.load %arg9[%c16, %c0_20] : memref<36x256xf32, #tpu.memory_space<vmem>>, vector<4x256xf32>
    tpu.vector_store %arg9[%c16, %c0_20], %22 {strides = array<i32>} : memref<36x256xf32, #tpu.memory_space<vmem>>, vector<4x256xf32>,
    %c0_21 = arith.constant 0 : index
    %c129 = arith.constant 129 : index
    %24 = vector.load %arg8[%c0_21, %c129] : memref<4x512xf32, #tpu.memory_space<vmem>>, vector<4x256xf32>
    %25 = vector.broadcast %7 : vector<1x256xf32> to vector<4x256xf32>
    %26 = arith.mulf %24, %25 : vector<4x256xf32>
    %c20 = arith.constant 20 : index
    %c0_22 = arith.constant 0 : index
    %27 = vector.load %arg9[%c20, %c0_22] : memref<36x256xf32, #tpu.memory_space<vmem>>, vector<4x256xf32>
    tpu.vector_store %arg9[%c20, %c0_22], %26 {strides = array<i32>} : memref<36x256xf32, #tpu.memory_space<vmem>>, vector<4x256xf32>,
    %c0_23 = arith.constant 0 : index
    %c143 = arith.constant 143 : index
    %28 = vector.load %arg8[%c0_23, %c143] : memref<4x512xf32, #tpu.memory_space<vmem>>, vector<4x256xf32>
    %29 = vector.broadcast %6 : vector<1x256xf32> to vector<4x256xf32>
    %30 = arith.mulf %28, %29 : vector<4x256xf32>
    %c24 = arith.constant 24 : index
    %c0_24 = arith.constant 0 : index
    %31 = vector.load %arg9[%c24, %c0_24] : memref<36x256xf32, #tpu.memory_space<vmem>>, vector<4x256xf32>
    tpu.vector_store %arg9[%c24, %c0_24], %30 {strides = array<i32>} : memref<36x256xf32, #tpu.memory_space<vmem>>, vector<4x256xf32>,
    %c0_25 = arith.constant 0 : index
    %c144 = arith.constant 144 : index
    %32 = vector.load %arg8[%c0_25, %c144] : memref<4x512xf32, #tpu.memory_space<vmem>>, vector<4x256xf32>
    %c28 = arith.constant 28 : index
    %c0_26 = arith.constant 0 : index
    %33 = vector.load %arg9[%c28, %c0_26] : memref<36x256xf32, #tpu.memory_space<vmem>>, vector<4x256xf32>
    tpu.vector_store %arg9[%c28, %c0_26], %32 {strides = array<i32>} : memref<36x256xf32, #tpu.memory_space<vmem>>, vector<4x256xf32>,
    %c0_27 = arith.constant 0 : index
    %c145 = arith.constant 145 : index
    %34 = vector.load %arg8[%c0_27, %c145] : memref<4x512xf32, #tpu.memory_space<vmem>>, vector<4x256xf32>
    %35 = vector.broadcast %7 : vector<1x256xf32> to vector<4x256xf32>
    %36 = arith.mulf %34, %35 : vector<4x256xf32>
    %c32 = arith.constant 32 : index
    %c0_28 = arith.constant 0 : index
    %37 = vector.load %arg9[%c32, %c0_28] : memref<36x256xf32, #tpu.memory_space<vmem>>, vector<4x256xf32>
    tpu.vector_store %arg9[%c32, %c0_28], %36 {strides = array<i32>} : memref<36x256xf32, #tpu.memory_space<vmem>>, vector<4x256xf32>,
    %c0_29 = arith.constant 0 : index
    %c0_30 = arith.constant 0 : index
    %38 = vector.load %arg2[%c0_29, %c0_30] : memref<4x36xf32, #tpu.memory_space<vmem>>, vector<4x36xf32>
    %c0_31 = arith.constant 0 : index
    %c0_32 = arith.constant 0 : index
    %39 = vector.load %arg9[%c0_31, %c0_32] : memref<36x256xf32, #tpu.memory_space<vmem>>, vector<36x256xf32>
    %cst_33 = arith.constant dense<0.000000e+00> : vector<4x256xf32>
    %40 = tpu.matmul %38, %39, %cst_33 {dimension_numbers = #tpu.dot_dimension_numbers<[1], [0], [0], [1], [0, 0, 1, 1], [], []>} : vector<4x36xf32>, vector<36x256xf32>, vector<4x256xf32> -> vector<4x256xf32>
    %c0_34 = arith.constant 0 : index
    %c0_35 = arith.constant 0 : index
    %41 = vector.load %arg3[%c0_34, %c0_35] : memref<4x1xf32, #tpu.memory_space<vmem>>, vector<4x1xf32>
    %42 = vector.broadcast %41 : vector<4x1xf32> to vector<4x256xf32>
    %43 = arith.addf %40, %42 : vector<4x256xf32>
    %cst_36 = arith.constant 0.000000e+00 : f32
    %44 = vector.broadcast %cst_36 : f32 to vector<4x256xf32>
    %45 = arith.cmpf ogt, %43, %44 : vector<4x256xf32>
    %cst_37 = arith.constant 0.00999999977 : f32
    %46 = vector.broadcast %cst_37 : f32 to vector<4x256xf32>
    %47 = arith.mulf %46, %43 : vector<4x256xf32>
    %48 = arith.select %45, %43, %47 : vector<4x256xi1>, vector<4x256xf32>
    %c0_38 = arith.constant 0 : index
    %c128_39 = arith.constant 128 : index
    %49 = vector.load %arg8[%c0_38, %c128_39] : memref<4x512xf32, #tpu.memory_space<vmem>>, vector<4x256xf32>
    tpu.vector_store %arg8[%c0_38, %c128_39], %48 {strides = array<i32>} : memref<4x512xf32, #tpu.memory_space<vmem>>, vector<4x256xf32>,
    %c0_40 = arith.constant 0 : index
    %c111_41 = arith.constant 111 : index
    %50 = vector.load %arg8[%c0_40, %c111_41] : memref<4x512xf32, #tpu.memory_space<vmem>>, vector<4x256xf32>
    %51 = vector.broadcast %6 : vector<1x256xf32> to vector<4x256xf32>
    %52 = arith.mulf %50, %51 : vector<4x256xf32>
    %c0_42 = arith.constant 0 : index
    %c0_43 = arith.constant 0 : index
    %53 = vector.load %arg9[%c0_42, %c0_43] : memref<36x256xf32, #tpu.memory_space<vmem>>, vector<4x256xf32>
    tpu.vector_store %arg9[%c0_42, %c0_43], %52 {strides = array<i32>} : memref<36x256xf32, #tpu.memory_space<vmem>>, vector<4x256xf32>,
    %c0_44 = arith.constant 0 : index
    %c112_45 = arith.constant 112 : index
    %54 = vector.load %arg8[%c0_44, %c112_45] : memref<4x512xf32, #tpu.memory_space<vmem>>, vector<4x256xf32>
    %c4_46 = arith.constant 4 : index
    %c0_47 = arith.constant 0 : index
    %55 = vector.load %arg9[%c4_46, %c0_47] : memref<36x256xf32, #tpu.memory_space<vmem>>, vector<4x256xf32>
    tpu.vector_store %arg9[%c4_46, %c0_47], %54 {strides = array<i32>} : memref<36x256xf32, #tpu.memory_space<vmem>>, vector<4x256xf32>,
    %c0_48 = arith.constant 0 : index
    %c113_49 = arith.constant 113 : index
    %56 = vector.load %arg8[%c0_48, %c113_49] : memref<4x512xf32, #tpu.memory_space<vmem>>, vector<4x256xf32>
    %57 = vector.broadcast %7 : vector<1x256xf32> to vector<4x256xf32>
    %58 = arith.mulf %56, %57 : vector<4x256xf32>
    %c8_50 = arith.constant 8 : index
    %c0_51 = arith.constant 0 : index
    %59 = vector.load %arg9[%c8_50, %c0_51] : memref<36x256xf32, #tpu.memory_space<vmem>>, vector<4x256xf32>
    tpu.vector_store %arg9[%c8_50, %c0_51], %58 {strides = array<i32>} : memref<36x256xf32, #tpu.memory_space<vmem>>, vector<4x256xf32>,
    %c0_52 = arith.constant 0 : index
    %c127_53 = arith.constant 127 : index
    %60 = vector.load %arg8[%c0_52, %c127_53] : memref<4x512xf32, #tpu.memory_space<vmem>>, vector<4x256xf32>
    %61 = vector.broadcast %6 : vector<1x256xf32> to vector<4x256xf32>
    %62 = arith.mulf %60, %61 : vector<4x256xf32>
    %c12_54 = arith.constant 12 : index
    %c0_55 = arith.constant 0 : index
    %63 = vector.load %arg9[%c12_54, %c0_55] : memref<36x256xf32, #tpu.memory_space<vmem>>, vector<4x256xf32>
    tpu.vector_store %arg9[%c12_54, %c0_55], %62 {strides = array<i32>} : memref<36x256xf32, #tpu.memory_space<vmem>>, vector<4x256xf32>,
    %c0_56 = arith.constant 0 : index
    %c128_57 = arith.constant 128 : index
    %64 = vector.load %arg8[%c0_56, %c128_57] : memref<4x512xf32, #tpu.memory_space<vmem>>, vector<4x256xf32>
    %c16_58 = arith.constant 16 : index
    %c0_59 = arith.constant 0 : index
    %65 = vector.load %arg9[%c16_58, %c0_59] : memref<36x256xf32, #tpu.memory_space<vmem>>, vector<4x256xf32>
    tpu.vector_store %arg9[%c16_58, %c0_59], %64 {strides = array<i32>} : memref<36x256xf32, #tpu.memory_space<vmem>>, vector<4x256xf32>,
    %c0_60 = arith.constant 0 : index
    %c129_61 = arith.constant 129 : index
    %66 = vector.load %arg8[%c0_60, %c129_61] : memref<4x512xf32, #tpu.memory_space<vmem>>, vector<4x256xf32>
    %67 = vector.broadcast %7 : vector<1x256xf32> to vector<4x256xf32>
    %68 = arith.mulf %66, %67 : vector<4x256xf32>
    %c20_62 = arith.constant 20 : index
    %c0_63 = arith.constant 0 : index
    %69 = vector.load %arg9[%c20_62, %c0_63] : memref<36x256xf32, #tpu.memory_space<vmem>>, vector<4x256xf32>
    tpu.vector_store %arg9[%c20_62, %c0_63], %68 {strides = array<i32>} : memref<36x256xf32, #tpu.memory_space<vmem>>, vector<4x256xf32>,
    %c0_64 = arith.constant 0 : index
    %c143_65 = arith.constant 143 : index
    %70 = vector.load %arg8[%c0_64, %c143_65] : memref<4x512xf32, #tpu.memory_space<vmem>>, vector<4x256xf32>
    %71 = vector.broadcast %6 : vector<1x256xf32> to vector<4x256xf32>
    %72 = arith.mulf %70, %71 : vector<4x256xf32>
    %c24_66 = arith.constant 24 : index
    %c0_67 = arith.constant 0 : index
    %73 = vector.load %arg9[%c24_66, %c0_67] : memref<36x256xf32, #tpu.memory_space<vmem>>, vector<4x256xf32>
    tpu.vector_store %arg9[%c24_66, %c0_67], %72 {strides = array<i32>} : memref<36x256xf32, #tpu.memory_space<vmem>>, vector<4x256xf32>,
    %c0_68 = arith.constant 0 : index
    %c144_69 = arith.constant 144 : index
    %74 = vector.load %arg8[%c0_68, %c144_69] : memref<4x512xf32, #tpu.memory_space<vmem>>, vector<4x256xf32>
    %c28_70 = arith.constant 28 : index
    %c0_71 = arith.constant 0 : index
    %75 = vector.load %arg9[%c28_70, %c0_71] : memref<36x256xf32, #tpu.memory_space<vmem>>, vector<4x256xf32>
    tpu.vector_store %arg9[%c28_70, %c0_71], %74 {strides = array<i32>} : memref<36x256xf32, #tpu.memory_space<vmem>>, vector<4x256xf32>,
    %c0_72 = arith.constant 0 : index
    %c145_73 = arith.constant 145 : index
    %76 = vector.load %arg8[%c0_72, %c145_73] : memref<4x512xf32, #tpu.memory_space<vmem>>, vector<4x256xf32>
    %77 = vector.broadcast %7 : vector<1x256xf32> to vector<4x256xf32>
    %78 = arith.mulf %76, %77 : vector<4x256xf32>
    %c32_74 = arith.constant 32 : index
    %c0_75 = arith.constant 0 : index
    %79 = vector.load %arg9[%c32_74, %c0_75] : memref<36x256xf32, #tpu.memory_space<vmem>>, vector<4x256xf32>
    tpu.vector_store %arg9[%c32_74, %c0_75], %78 {strides = array<i32>} : memref<36x256xf32, #tpu.memory_space<vmem>>, vector<4x256xf32>,
    %c0_76 = arith.constant 0 : index
    %c0_77 = arith.constant 0 : index
    %80 = vector.load %arg4[%c0_76, %c0_77] : memref<8x36xf32, #tpu.memory_space<vmem>>, vector<8x36xf32>
    %c0_78 = arith.constant 0 : index
    %c0_79 = arith.constant 0 : index
    %81 = vector.load %arg9[%c0_78, %c0_79] : memref<36x256xf32, #tpu.memory_space<vmem>>, vector<36x256xf32>
    %cst_80 = arith.constant dense<0.000000e+00> : vector<8x256xf32>
    %82 = tpu.matmul %80, %81, %cst_80 {dimension_numbers = #tpu.dot_dimension_numbers<[1], [0], [0], [1], [0, 0, 1, 1], [], []>} : vector<8x36xf32>, vector<36x256xf32>, vector<8x256xf32> -> vector<8x256xf32>
    %c0_81 = arith.constant 0 : index
    %c0_82 = arith.constant 0 : index
    %83 = vector.load %arg5[%c0_81, %c0_82] : memref<8x1xf32, #tpu.memory_space<vmem>>, vector<8x1xf32>
    %84 = vector.broadcast %83 : vector<8x1xf32> to vector<8x256xf32>
    %85 = arith.addf %82, %84 : vector<8x256xf32>
    %c0_83 = arith.constant 0 : index
    %c0_84 = arith.constant 0 : index
    %c0_85 = arith.constant 0 : index
    %86 = vector.load %arg7[%c0_83, %c0_84, %c0_85] : memref<1x8x256xf32, #tpu.memory_space<vmem>>, vector<1x8x256xf32>
    %87 = vector.shape_cast %86 : vector<1x8x256xf32> to vector<8x256xf32>
    %88 = vector.shape_cast %85 : vector<8x256xf32> to vector<1x8x256xf32>
    tpu.vector_store %arg7[%c0_83, %c0_84, %c0_85], %88 {strides = array<i32>} : memref<1x8x256xf32, #tpu.memory_space<vmem>>, vector<1x8x256xf32>,
    return
  }
  func.func @transform_0(%arg0: i32) -> (i32, i32, i32) {
    %c0_i32 = arith.constant 0 : i32
    %c0_i32_0 = arith.constant 0 : i32
    %c0_i32_1 = arith.constant 0 : i32
    return %arg0, %c0_i32, %c0_i32_0 : i32, i32, i32
  }
  func.func @transform_1(%arg0: i32) -> (i32, i32) {
    %c0_i32 = arith.constant 0 : i32
    %c0_i32_0 = arith.constant 0 : i32
    %c0_i32_1 = arith.constant 0 : i32
    return %c0_i32, %c0_i32_0 : i32, i32
  }
  func.func @transform_2(%arg0: i32) -> (i32, i32) {
    %c0_i32 = arith.constant 0 : i32
    %c0_i32_0 = arith.constant 0 : i32
    %c0_i32_1 = arith.constant 0 : i32
    return %c0_i32, %c0_i32_0 : i32, i32
  }
  func.func @transform_3(%arg0: i32) -> (i32, i32) {
    %c0_i32 = arith.constant 0 : i32
    %c0_i32_0 = arith.constant 0 : i32
    %c0_i32_1 = arith.constant 0 : i32
    return %c0_i32, %c0_i32_0 : i32, i32
  }
  func.func @transform_4(%arg0: i32) -> (i32, i32) {
    %c0_i32 = arith.constant 0 : i32
    %c0_i32_0 = arith.constant 0 : i32
    %c0_i32_1 = arith.constant 0 : i32
    return %c0_i32, %c0_i32_0 : i32, i32
  }
  func.func @transform_5(%arg0: i32) -> (i32, i32) {
    %c0_i32 = arith.constant 0 : i32
    %c0_i32_0 = arith.constant 0 : i32
    %c0_i32_1 = arith.constant 0 : i32
    return %c0_i32, %c0_i32_0 : i32, i32
  }
  func.func @transform_6(%arg0: i32) -> (i32, i32, i32) {
    %c0_i32 = arith.constant 0 : i32
    %c0_i32_0 = arith.constant 0 : i32
    %c0_i32_1 = arith.constant 0 : i32
    return %arg0, %c0_i32, %c0_i32_0 : i32, i32, i32
  }
}

</mosaic_0001>

<llo_original>
// kernel: tpu_custom_call.1
$region0: #{tpu_custom_call.1}
  #allocation0 [shape = 'u32[]', space=smem, size = 0x4, offset = 0x4, fixed_abs, tag = 'smem constant byte address 0x4 - core index']
  #allocation1 [shape = 'u32[144,128]{1,0:T(1,128)}', space=vmem, size = 0x12000, scoped, tag = 'internal scratch']
  #allocation2 [shape = 'f32[4,512]{1,0:T(4,128)}', space=vmem, size = 0x2000, scoped, tag = 'scratch operand']
  #allocation3 [shape = 'f32[36,256]{1,0:T(8,128)}', space=vmem, size = 0xa000, scoped, tag = 'scratch operand']
  %s0 = inlined_call_operand.hbm [shape: f32[2,4,256], index: 0, kind: input, shape index: {}]
  %s1 = inlined_call_operand.hbm [shape: f32[4,36], index: 1, kind: input, shape index: {}]
  %s2 = inlined_call_operand.vmem [shape: f32[4,1], index: 2, kind: input, shape index: {}]
  %s3 = inlined_call_operand.vmem [shape: f32[8,36], index: 3, kind: input, shape index: {}]
  %s4 = inlined_call_operand.vmem [shape: f32[8,1], index: 4, kind: input, shape index: {}]
  %s5 = inlined_call_operand.vmem [shape: f32[3,256], index: 5, kind: input, shape index: {}]
  %s6 = inlined_call_operand.hbm [shape: f32[2,8,256], index: 6, kind: output, shape index: {}]
  %s7 = sld [smem:[#allocation0]]
  $region65: #{tpu_custom_call.1} parent=0
    _
  %s9 = ssub.s32 1, %s7
  %s10 = scalar_select 0, %s9, %s7
  $region1: #{tpu_custom_call.1} parent=0
    #allocation4 [shape = 'u8[8192]{0}', space=vmem, size = 0x2000, scoped, tag = 'input window, operand 0']
    #allocation5 [shape = 's32[2]{0}', space=sflag, size = 0x8, scoped, tag = 'scoped memory for tpu_custom_call.1']
    #allocation6 [shape = 's32[2]{0}', space=sflag, size = 0x8, scoped, tag = 'scoped memory for tpu_custom_call.1']
    #allocation7 [shape = 'u8[2048]{0}', space=vmem, size = 0x800, scoped, tag = 'input window, operand 1, single buffered']
    #allocation8 [shape = 's32[1]{0}', space=sflag, size = 0x4, scoped, tag = 'scoped memory for tpu_custom_call.1']
    #allocation9 [shape = 'u8[16384]{0}', space=vmem, size = 0x4000, scoped, tag = 'output window, operand 0']
    %11 = vsyncpa [#allocation5], 0
    %s12 = scalar_lea.sflag [#allocation5], 1
    %13 = vsyncpa %s12, 0
    %14 = vsyncpa [#allocation8], 0
    %15 = vsyncpa [#allocation6], 0
    %s16 = scalar_lea.sflag [#allocation6], 1
    %17 = vsyncpa %s16, 0
    loop: start=0, step=1, limit=4
    $region2: #{tpu_custom_call.1} parent=1 // loop_pre_header
      _
    $region3: #{tpu_custom_call.1} parent=1 // loop_header
      %s19 = sphi 0, %s23
      %p20 = scmp.ge.s32.totalorder %s19, 4
      %s29 = sphi 0, %s31
      %s32 = sphi 0, %s29
      %s33 = sphi 0, %s32
      %s49 = sphi 0, %s33
      %s53 = sphi 0, %s53
      %s55 = sphi 0, %s53
      %s56 = sphi 0, %s55
      %s70 = sphi 0, %s56
      %s74 = sphi 0, %s74
      %s76 = sphi 0, %s74
      %s77 = sphi 0, %s76
      %s91 = sphi 0, %s77
      %s95 = sphi 0, %s95
      %s97 = sphi 0, %s95
      %s98 = sphi 0, %s97
      %s112 = sphi 0, %s98
      %s116 = sphi 0, %s116
      %s118 = sphi 0, %s116
      %s119 = sphi 0, %s118
      %s133 = sphi 0, %s119
      %s137 = sphi 0, %s137
      %s139 = sphi 0, %s137
      %s140 = sphi 0, %s139
      %s154 = sphi 0, %s140
      %s160 = sphi 0, %s162
      %s163 = sphi 0, %s160
      %s164 = sphi 0, %s163
      %s180 = sphi 0, %s164
    $region4: #{tpu_custom_call.1} parent=1 // loop_header_branch
      %22 = sbr.rel (%p20) target = $region8
    $region5: #{tpu_custom_call.1} parent=1 // loop_body
      %s24 = ssub.s32 %s19, 1
      %s25 = ssub.s32 %s19, 2
      %s26 = sadd.s32 %s19, 1
      %s27 = ssub.s32 %s19, %s26
      %p28 = scmp.eq.s32.totalorder %s27, 0
      %s30 = sadd.s32 %s29, 1
      %s31 = scalar_select %p28, %s29, %s30
      %p34 = pneg %p28
      %p35 = scmp.eq.s32.totalorder %s19, 1
      %p36 = por %p34, %p35
      %p37 = scmp.ne.s32.totalorder %s29, %s32
      %p38 = scmp.eq.s32.totalorder %s19, 0
      %p39 = por %p37, %p38
      %p40 = scmp.ne.s32.totalorder %s29, %s32
      %p41 = scmp.eq.s32.totalorder %s24, 1
      %p42 = por %p40, %p41
      %p43 = scmp.ne.s32.totalorder %s32, %s33
      %p44 = scmp.eq.s32.totalorder %s24, 0
      %p45 = por %p43, %p44
      %p46 = scmp.ne.s32.totalorder %s32, %s33
      %p47 = scmp.eq.s32.totalorder %s25, 1
      %p48 = por %p46, %p47
      %p50 = scmp.ne.s32.totalorder %s33, %s49
      %p51 = scmp.eq.s32.totalorder %s25, 0
      %p52 = por %p50, %p51
      %s54 = sadd.s32 %s53, 1
      %p57 = scmp.eq.s32.totalorder %s19, 1
      %p58 = scmp.ne.s32.totalorder %s53, %s55
      %p59 = scmp.eq.s32.totalorder %s19, 0
      %p60 = por %p58, %p59
      %p61 = scmp.ne.s32.totalorder %s53, %s55
      %p62 = scmp.eq.s32.totalorder %s24, 1
      %p63 = por %p61, %p62
      %p64 = scmp.ne.s32.totalorder %s55, %s56
      %p65 = scmp.eq.s32.totalorder %s24, 0
      %p66 = por %p64, %p65
      %p67 = scmp.ne.s32.totalorder %s55, %s56
      %p68 = scmp.eq.s32.totalorder %s25, 1
      %p69 = por %p67, %p68
      %p71 = scmp.ne.s32.totalorder %s56, %s70
      %p72 = scmp.eq.s32.totalorder %s25, 0
      %p73 = por %p71, %p72
      %s75 = sadd.s32 %s74, 1
      %p78 = scmp.eq.s32.totalorder %s19, 1
      %p79 = scmp.ne.s32.totalorder %s74, %s76
      %p80 = scmp.eq.s32.totalorder %s19, 0
      %p81 = por %p79, %p80
      %p82 = scmp.ne.s32.totalorder %s74, %s76
      %p83 = scmp.eq.s32.totalorder %s24, 1
      %p84 = por %p82, %p83
      %p85 = scmp.ne.s32.totalorder %s76, %s77
      %p86 = scmp.eq.s32.totalorder %s24, 0
      %p87 = por %p85, %p86
      %p88 = scmp.ne.s32.totalorder %s76, %s77
      %p89 = scmp.eq.s32.totalorder %s25, 1
      %p90 = por %p88, %p89
      %p92 = scmp.ne.s32.totalorder %s77, %s91
      %p93 = scmp.eq.s32.totalorder %s25, 0
      %p94 = por %p92, %p93
      %s96 = sadd.s32 %s95, 1
      %p99 = scmp.eq.s32.totalorder %s19, 1
      %p100 = scmp.ne.s32.totalorder %s95, %s97
      %p101 = scmp.eq.s32.totalorder %s19, 0
      %p102 = por %p100, %p101
      %p103 = scmp.ne.s32.totalorder %s95, %s97
      %p104 = scmp.eq.s32.totalorder %s24, 1
      %p105 = por %p103, %p104
      %p106 = scmp.ne.s32.totalorder %s97, %s98
      %p107 = scmp.eq.s32.totalorder %s24, 0
      %p108 = por %p106, %p107
      %p109 = scmp.ne.s32.totalorder %s97, %s98
      %p110 = scmp.eq.s32.totalorder %s25, 1
      %p111 = por %p109, %p110
      %p113 = scmp.ne.s32.totalorder %s98, %s112
      %p114 = scmp.eq.s32.totalorder %s25, 0
      %p115 = por %p113, %p114
      %s117 = sadd.s32 %s116, 1
      %p120 = scmp.eq.s32.totalorder %s19, 1
      %p121 = scmp.ne.s32.totalorder %s116, %s118
      %p122 = scmp.eq.s32.totalorder %s19, 0
      %p123 = por %p121, %p122
      %p124 = scmp.ne.s32.totalorder %s116, %s118
      %p125 = scmp.eq.s32.totalorder %s24, 1
      %p126 = por %p124, %p125
      %p127 = scmp.ne.s32.totalorder %s118, %s119
      %p128 = scmp.eq.s32.totalorder %s24, 0
      %p129 = por %p127, %p128
      %p130 = scmp.ne.s32.totalorder %s118, %s119
      %p131 = scmp.eq.s32.totalorder %s25, 1
      %p132 = por %p130, %p131
      %p134 = scmp.ne.s32.totalorder %s119, %s133
      %p135 = scmp.eq.s32.totalorder %s25, 0
      %p136 = por %p134, %p135
      %s138 = sadd.s32 %s137, 1
      %p141 = scmp.eq.s32.totalorder %s19, 1
      %p142 = scmp.ne.s32.totalorder %s137, %s139
      %p143 = scmp.eq.s32.totalorder %s19, 0
      %p144 = por %p142, %p143
      %p145 = scmp.ne.s32.totalorder %s137, %s139
      %p146 = scmp.eq.s32.totalorder %s24, 1
      %p147 = por %p145, %p146
      %p148 = scmp.ne.s32.totalorder %s139, %s140
      %p149 = scmp.eq.s32.totalorder %s24, 0
      %p150 = por %p148, %p149
      %p151 = scmp.ne.s32.totalorder %s139, %s140
      %p152 = scmp.eq.s32.totalorder %s25, 1
      %p153 = por %p151, %p152
      %p155 = scmp.ne.s32.totalorder %s140, %s154
      %p156 = scmp.eq.s32.totalorder %s25, 0
      %p157 = por %p155, %p156
      %s158 = ssub.s32 %s19, %s26
      %p159 = scmp.eq.s32.totalorder %s158, 0
      %s161 = sadd.s32 %s160, 1
      %s162 = scalar_select %p159, %s160, %s161
      %p165 = pneg %p159
      %p166 = scmp.eq.s32.totalorder %s19, 1
      %p167 = por %p165, %p166
      %p168 = scmp.ne.s32.totalorder %s160, %s163
      %p169 = scmp.eq.s32.totalorder %s19, 0
      %p170 = por %p168, %p169
      %p171 = scmp.ne.s32.totalorder %s160, %s163
      %p172 = scmp.eq.s32.totalorder %s24, 1
      %p173 = por %p171, %p172
      %p174 = scmp.ne.s32.totalorder %s163, %s164
      %p175 = scmp.eq.s32.totalorder %s24, 0
      %p176 = por %p174, %p175
      %p177 = scmp.ne.s32.totalorder %s163, %s164
      %p178 = scmp.eq.s32.totalorder %s25, 1
      %p179 = por %p177, %p178
      %p181 = scmp.ne.s32.totalorder %s164, %s180
      %p182 = scmp.eq.s32.totalorder %s25, 0
      %p183 = por %p181, %p182
      %p184 = scmp.le.s32.totalorder 1, %s19
      %p185 = scmp.lt.s32.totalorder %s19, 3
      %p186 = pnand %p184, %p185
      %p187 = pneg %p186
      // Predicated region
      $region9: #{tpu_custom_call.1} parent=5 // pred_check
        _
      $region10: #{tpu_custom_call.1} parent=5 // pred_check_branch
        %189 = sbr.rel (%p186) target = $region12
      $region11: #{tpu_custom_call.1} parent=5 // pred_region
        %s190 = ssub.s32 %s19, 1
        // Predicated region
        $region13: #{tpu_custom_call.1} parent=11 // pred_check
          %p191 = pneg %p66
        $region14: #{tpu_custom_call.1} parent=11 // pred_check_branch
          %193 = sbr.rel (%p191) target = $region16
        $region15: #{tpu_custom_call.1} parent=11 // pred_region
          %s195 = ssub.s32 64, 64
          %196 = vsyncadd [#allocation8], %s195
          %s198 = sshll.u32 [#allocation7], 4
          %s199 = int_to_ptr.vmem [resolvable:$true] %s198
          %201 = dma.hbm_to_vmem [thread:$0]  %s1, 64, %s199, [#allocation8]
        $region16: #{tpu_custom_call.1} parent=11 // pred_fallthru
          _
        // Predicated region
        $region17: #{tpu_custom_call.1} parent=11 // pred_check
          %p202 = pneg %p87
        $region18: #{tpu_custom_call.1} parent=11 // pred_check_branch
          %204 = sbr.rel (%p202) target = $region20
        $region19: #{tpu_custom_call.1} parent=11 // pred_region
          _
        $region20: #{tpu_custom_call.1} parent=11 // pred_fallthru
          _
        // Predicated region
        $region21: #{tpu_custom_call.1} parent=11 // pred_check
          %p205 = pneg %p108
        $region22: #{tpu_custom_call.1} parent=11 // pred_check_branch
          %207 = sbr.rel (%p205) target = $region24
        $region23: #{tpu_custom_call.1} parent=11 // pred_region
          _
        $region24: #{tpu_custom_call.1} parent=11 // pred_fallthru
          _
        // Predicated region
        $region25: #{tpu_custom_call.1} parent=11 // pred_check
          %p208 = pneg %p129
        $region26: #{tpu_custom_call.1} parent=11 // pred_check_branch
          %210 = sbr.rel (%p208) target = $region28
        $region27: #{tpu_custom_call.1} parent=11 // pred_region
          _
        $region28: #{tpu_custom_call.1} parent=11 // pred_fallthru
          _
        // Predicated region
        $region29: #{tpu_custom_call.1} parent=11 // pred_check
          %p211 = pneg %p150
        $region30: #{tpu_custom_call.1} parent=11 // pred_check_branch
          %213 = sbr.rel (%p211) target = $region32
        $region31: #{tpu_custom_call.1} parent=11 // pred_region
          _
        $region32: #{tpu_custom_call.1} parent=11 // pred_fallthru
          _
      $region12: #{tpu_custom_call.1} parent=5 // pred_fallthru
        _
      %p214 = scmp.lt.s32.totalorder %s19, 2
      // Predicated region
      $region33: #{tpu_custom_call.1} parent=5 // pred_check
        %p215 = pneg %p214
      $region34: #{tpu_custom_call.1} parent=5 // pred_check_branch
        %217 = sbr.rel (%p215) target = $region36
      $region35: #{tpu_custom_call.1} parent=5 // pred_region
        // Predicated region
        $region37: #{tpu_custom_call.1} parent=35 // pred_check
          %p218 = pneg %p39
        $region38: #{tpu_custom_call.1} parent=35 // pred_check_branch
          %220 = sbr.rel (%p218) target = $region40
        $region39: #{tpu_custom_call.1} parent=35 // pred_region
          %s221 = sand.u32 %s29, 1
          %s222 = scalar_lea.sflag [#allocation5], %s221
          %s223 = sand.u32 %s29, 1
          %s224 = smul.addr %s223, 8
          %s225 = scalar_lea.vmem [#allocation4], %s224
          %s227 = ssub.s32 128, 128
          %228 = vsyncadd %s222, %s227
          %s229 = smul.addr %s19, 2
          %s230 = smul.addr %s229, 64
          %s231 = scalar_lea.hbm %s0, %s230
          %s233 = sshll.u32 %s225, 4
          %s234 = int_to_ptr.vmem [resolvable:$true] %s233
          %236 = dma.hbm_to_vmem [thread:$0]  %s231, 128, %s234, %s222
        $region40: #{tpu_custom_call.1} parent=35 // pred_fallthru
          _
      $region36: #{tpu_custom_call.1} parent=5 // pred_fallthru
        _
      %p237 = scmp.le.s32.totalorder 1, %s19
      %p238 = scmp.lt.s32.totalorder %s19, 3
      %p239 = pnand %p237, %p238
      %p240 = pneg %p239
      // Predicated region
      $region41: #{tpu_custom_call.1} parent=5 // pred_check
        _
      $region42: #{tpu_custom_call.1} parent=5 // pred_check_branch
        %242 = sbr.rel (%p239) target = $region44
      $region43: #{tpu_custom_call.1} parent=5 // pred_region
        %s243 = ssub.s32 %s19, 1
        %s244 = sand.u32 %s32, 1
        %s245 = scalar_lea.sflag [#allocation5], %s244
        %s246 = sand.u32 %s32, 1
        %s247 = smul.addr %s246, 8
        %s248 = scalar_lea.vmem [#allocation4], %s247
        // Predicated region
        $region45: #{tpu_custom_call.1} parent=43 // pred_check
          %p249 = pneg %p45
        $region46: #{tpu_custom_call.1} parent=43 // pred_check_branch
          %251 = sbr.rel (%p249) target = $region48
        $region47: #{tpu_custom_call.1} parent=43 // pred_region
          %252 = dma.done %s245, 128
        $region48: #{tpu_custom_call.1} parent=43 // pred_fallthru
          _
        // Predicated region
        $region49: #{tpu_custom_call.1} parent=43 // pred_check
          %p253 = pneg %p66
        $region50: #{tpu_custom_call.1} parent=43 // pred_check_branch
          %255 = sbr.rel (%p253) target = $region52
        $region51: #{tpu_custom_call.1} parent=43 // pred_region
          %256 = dma.done [#allocation8], 64
        $region52: #{tpu_custom_call.1} parent=43 // pred_fallthru
          _
        %s257 = sand.u32 %s32, 1
        %s258 = scalar_lea.sflag [#allocation5], %s257
        %s259 = sand.u32 %s32, 1
        %s260 = smul.addr %s259, 8
        %s261 = scalar_lea.vmem [#allocation4], %s260
        %p262 = pneg %p45
        %p263 = pneg %p42
        %p264 = pneg %p66
        %p265 = pneg %p63
        %p266 = pneg %p87
        %p267 = pneg %p84
        %p268 = pneg %p108
        %p269 = pneg %p105
        %p270 = pneg %p129
        %p271 = pneg %p126
        %p272 = pneg %p150
        %p273 = pneg %p147
        %p274 = pneg %p176
        %p275 = pneg %p173
        %s276 = sand.u32 %s163, 1
        %s277 = scalar_lea.sflag [#allocation6], %s276
        %s278 = sand.u32 %s163, 1
        %s279 = smul.addr %s278, 16
        %s280 = scalar_lea.vmem [#allocation9], %s279
        %281 = vst [vmem:[#allocation2] sm:$0xf] 0.0
        %282 = vst [vmem:[#allocation2 + $0xc] sm:$0xf] 0.0
        %v283 = vld [vmem:[%s248] sm:$0xff]
        %284 = vst [vmem:[#allocation2 + $0x4] sm:$0xff] %v283
        %v285 = vld [vmem:[%s5] ss:$4 sm:$0x3]
        %s286 = scalar_lea.vmem %s5, 2
        %v287 = vld [vmem:[%s286] ss:$4 sm:$0x3]
        %v288 = vld [vmem:[#allocation2] sm:$0xff]
        %v289 = vld [vmem:[#allocation2 + $0x8] sm:$0xf]
        %v291 = vlaneseq
        %v292 = vshrl.u32 %v291, 7
        %v293 = vsub.s32 0, %v292
        %v294 = vrot.slane %v285, %v293
        %v295 = vlaneseq
        %v296 = vshrl.u32 %v295, 7
        %v297 = vsub.s32 1, %v296
        %v298 = vrot.slane %v285, %v297
        %v299 = vcombine.low %v294, %v298
        %300 = vrot.lane.b32.xlu0 %v299, 111
        %v301 = vpop.permute.xlu0 %300
        %v302 = vrot.slane %v301, 4
        %vm303 = vcmask 908288
        %v304 = vsel %vm303, %v302, %v301
        %v307 = vmul.f32 %v288, %v304
        %v308 = vmul.f32 %v289, %v302
        %v311 = vcombine.high %v307, %v307
        %312 = vrot.lane.b32.xlu0 %v307, 17
        %v313 = vpop.permute.xlu0 %312
        %314 = vrot.lane.b32.xlu0 %v311, 17
        %v315 = vpop.permute.xlu0 %314
        %316 = vrot.lane.b32.xlu0 %v308, 17
        %v317 = vpop.permute.xlu0 %316
        %vm318 = vcmask 138240
        %v319 = vsel %vm318, %v313, %v315
        %v320 = vsel %vm318, %v315, %v317
        %323 = vst [vmem:[#allocation3] sm:$0xf] %v319
        %324 = vst [vmem:[#allocation3 + $0x8] sm:$0xf] %v320
        %v325 = vld [vmem:[#allocation2] sm:$0xff]
        %v326 = vld [vmem:[#allocation2 + $0x8] sm:$0xf]
        %v329 = vcombine.low %v325, %v325
        %v330 = vcombine.low %v326, %v326
        %331 = vrot.lane.b32.xlu0 %v329, 16
        %v332 = vpop.permute.xlu0 %331
        %333 = vrot.lane.b32.xlu0 %v325, 16
        %v334 = vpop.permute.xlu0 %333
        %335 = vrot.lane.b32.xlu0 %v330, 16
        %v336 = vpop.permute.xlu0 %335
        %vm337 = vcmask 130048
        %v338 = vsel %vm337, %v332, %v334
        %v339 = vsel %vm337, %v334, %v336
        %342 = vst [vmem:[#allocation3] sm:$0xf0] %v338
        %343 = vst [vmem:[#allocation3 + $0x8] sm:$0xf0] %v339
        %v344 = vld [vmem:[#allocation2] sm:$0xff]
        %v345 = vld [vmem:[#allocation2 + $0x8] sm:$0xf]
        %v347 = vlaneseq
        %v348 = vshrl.u32 %v347, 7
        %v349 = vsub.s32 0, %v348
        %v350 = vrot.slane %v287, %v349
        %v351 = vlaneseq
        %v352 = vshrl.u32 %v351, 7
        %v353 = vsub.s32 1, %v352
        %v354 = vrot.slane %v287, %v353
        %v355 = vcombine.low %v350, %v354
        %356 = vrot.lane.b32.xlu0 %v355, 113
        %v357 = vpop.permute.xlu0 %356
        %v358 = vrot.slane %v357, 4
        %vm359 = vcmask 924672
        %v360 = vsel %vm359, %v358, %v357
        %v363 = vmul.f32 %v344, %v360
        %v364 = vmul.f32 %v345, %v358
        %v367 = vcombine.high %v363, %v363
        %368 = vrot.lane.b32.xlu0 %v363, 15
        %v369 = vpop.permute.xlu0 %368
        %370 = vrot.lane.b32.xlu0 %v367, 15
        %v371 = vpop.permute.xlu0 %370
        %372 = vrot.lane.b32.xlu0 %v364, 15
        %v373 = vpop.permute.xlu0 %372
        %vm374 = vcmask 121856
        %v375 = vsel %vm374, %v369, %v371
        %v376 = vsel %vm374, %v371, %v373
        %379 = vst [vmem:[#allocation3 + $0x10] sm:$0xf] %v375
        %380 = vst [vmem:[#allocation3 + $0x18] sm:$0xf] %v376
        %v381 = vld [vmem:[#allocation2] sm:$0xff]
        %v382 = vld [vmem:[#allocation2 + $0x8] sm:$0xf]
        %383 = vrot.lane.b32.xlu0 %v299, 127
        %v384 = vpop.permute.xlu0 %383
        %v385 = vrot.slane %v384, 4
        %vm386 = vcmask 1039360
        %v387 = vsel %vm386, %v385, %v384
        %v390 = vmul.f32 %v381, %v387
        %v391 = vmul.f32 %v382, %v385
        %v394 = vcombine.low %v390, %v390
        %v395 = vcombine.low %v391, %v391
        %396 = vrot.lane.b32.xlu0 %v394, 1
        %v397 = vpop.permute.xlu0 %396
        %398 = vrot.lane.b32.xlu0 %v390, 1
        %v399 = vpop.permute.xlu0 %398
        %400 = vrot.lane.b32.xlu0 %v395, 1
        %v401 = vpop.permute.xlu0 %400
        %vm402 = vcmask 7168
        %v403 = vsel %vm402, %v397, %v399
        %v404 = vsel %vm402, %v399, %v401
        %407 = vst [vmem:[#allocation3 + $0x10] sm:$0xf0] %v403
        %408 = vst [vmem:[#allocation3 + $0x18] sm:$0xf0] %v404
        %v409 = vld [vmem:[#allocation2 + $0x4] sm:$0xff]
        %v411 = vcombine.high %v409, %v409
        %413 = vst [vmem:[#allocation3 + $0x20] sm:$0xf] %v409
        %414 = vst [vmem:[#allocation3 + $0x28] sm:$0xf] %v411
        %v415 = vld [vmem:[#allocation2 + $0x4] sm:$0xff]
        %v416 = vld [vmem:[#allocation2 + $0xc] sm:$0xf]
        %417 = vrot.lane.b32.xlu0 %v355, 1
        %v418 = vpop.permute.xlu0 %417
        %v419 = vrot.slane %v418, 4
        %v420 = vsel %vm402, %v419, %v418
        %v423 = vmul.f32 %v415, %v420
        %v424 = vmul.f32 %v416, %v419
        %v427 = vcombine.low %v423, %v423
        %v428 = vcombine.low %v424, %v424
        %429 = vrot.lane.b32.xlu0 %v427, 127
        %v430 = vpop.permute.xlu0 %429
        %431 = vrot.lane.b32.xlu0 %v423, 127
        %v432 = vpop.permute.xlu0 %431
        %433 = vrot.lane.b32.xlu0 %v428, 127
        %v434 = vpop.permute.xlu0 %433
        %v435 = vsel %vm386, %v430, %v432
        %v436 = vsel %vm386, %v432, %v434
        %439 = vst [vmem:[#allocation3 + $0x20] sm:$0xf0] %v435
        %440 = vst [vmem:[#allocation3 + $0x28] sm:$0xf0] %v436
        %v441 = vld [vmem:[#allocation2 + $0x4] sm:$0xff]
        %v442 = vld [vmem:[#allocation2 + $0xc] sm:$0xf]
        %443 = vrot.lane.b32.xlu0 %v299, 15
        %v444 = vpop.permute.xlu0 %443
        %v445 = vrot.slane %v444, 4
        %v446 = vsel %vm374, %v445, %v444
        %v449 = vmul.f32 %v441, %v446
        %v450 = vmul.f32 %v442, %v445
        %v453 = vcombine.high %v449, %v449
        %454 = vrot.lane.b32.xlu0 %v449, 113
        %v455 = vpop.permute.xlu0 %454
        %456 = vrot.lane.b32.xlu0 %v453, 113
        %v457 = vpop.permute.xlu0 %456
        %458 = vrot.lane.b32.xlu0 %v450, 113
        %v459 = vpop.permute.xlu0 %458
        %v460 = vsel %vm359, %v455, %v457
        %v461 = vsel %vm359, %v457, %v459
        %464 = vst [vmem:[#allocation3 + $0x30] sm:$0xf] %v460
        %465 = vst [vmem:[#allocation3 + $0x38] sm:$0xf] %v461
        %v466 = vld [vmem:[#allocation2 + $0x4] sm:$0xff]
        %v467 = vld [vmem:[#allocation2 + $0xc] sm:$0xf]
        %v470 = vcombine.low %v466, %v466
        %v471 = vcombine.low %v467, %v467
        %472 = vrot.lane.b32.xlu0 %v470, 112
        %v473 = vpop.permute.xlu0 %472
        %474 = vrot.lane.b32.xlu0 %v466, 112
        %v475 = vpop.permute.xlu0 %474
        %476 = vrot.lane.b32.xlu0 %v471, 112
        %v477 = vpop.permute.xlu0 %476
        %vm478 = vcmask 916480
        %v479 = vsel %vm478, %v473, %v475
        %v480 = vsel %vm478, %v475, %v477
        %483 = vst [vmem:[#allocation3 + $0x30] sm:$0xf0] %v479
        %484 = vst [vmem:[#allocation3 + $0x38] sm:$0xf0] %v480
        %v485 = vld [vmem:[#allocation2 + $0x4] sm:$0xff]
        %v486 = vld [vmem:[#allocation2 + $0xc] sm:$0xf]
        %487 = vrot.lane.b32.xlu0 %v355, 17
        %v488 = vpop.permute.xlu0 %487
        %v489 = vrot.slane %v488, 4
        %v490 = vsel %vm318, %v489, %v488
        %v493 = vmul.f32 %v485, %v490
        %v494 = vmul.f32 %v486, %v489
        %v497 = vcombine.high %v493, %v493
        %498 = vrot.lane.b32.xlu0 %v493, 111
        %v499 = vpop.permute.xlu0 %498
        %500 = vrot.lane.b32.xlu0 %v497, 111
        %v501 = vpop.permute.xlu0 %500
        %502 = vrot.lane.b32.xlu0 %v494, 111
        %v503 = vpop.permute.xlu0 %502
        %v504 = vsel %vm303, %v499, %v501
        %v505 = vsel %vm303, %v501, %v503
        %508 = vst [vmem:[#allocation3 + $0x40] sm:$0xf] %v504
        %509 = vst [vmem:[#allocation3 + $0x48] sm:$0xf] %v505
        %v510 = vld [vmem:[#allocation7] sm:$0xf]
        %v511 = vld [vmem:[#allocation3] sm:$0xff]
        %v512 = vld [vmem:[#allocation3 + $0x8] sm:$0xff]
        %v513 = vld [vmem:[#allocation3 + $0x10] sm:$0xff]
        %v514 = vld [vmem:[#allocation3 + $0x18] sm:$0xff]
        %v515 = vld [vmem:[#allocation3 + $0x20] sm:$0xff]
        %v516 = vld [vmem:[#allocation3 + $0x28] sm:$0xff]
        %v517 = vld [vmem:[#allocation3 + $0x30] sm:$0xff]
        %v518 = vld [vmem:[#allocation3 + $0x38] sm:$0xff]
        %v519 = vld [vmem:[#allocation3 + $0x40] sm:$0xf]
        %v520 = vld [vmem:[#allocation3 + $0x48] sm:$0xf]
        %v521 = vld [vmem:[%s2] sm:$0xf]
        %523 = vset.pattern.permute.xlu0 0
        %524 = vperm.xlu0 %523, %v521
        %v525 = vpop.permute.xlu0 %524
        %vm527 = vcmask 293888
        %v529 = vsel %vm527, %v510, 0
        %vm531 = vcmask 1043456
        %v533 = vsel %vm531, %v519, 0
        %v536 = vsel %vm531, %v520, 0
        %538 = vmatprep.subr.mxu0 0.0
        %539 = vmatpush1.msra.mxu0 0.0
        %540 = vmatprep.subr.mxu0 0.0
        %541 = vmatpush1.msra.mxu0 0.0
        %542 = vmatprep.subr.mxu0 0.0
        %543 = vmatpush1.msra.mxu0 0.0
        %544 = vmatprep.subr.mxu0 0.0
        %545 = vmatpush1.msra.mxu0 0.0
        %546 = vmatprep.subr.mxu0 0.0
        %547 = vmatpush1.msra.mxu0 0.0
        %548 = vmatprep.subr.mxu0 0.0
        %549 = vmatpush1.msra.mxu0 0.0
        %550 = vmatprep.subr.mxu0 0.0
        %551 = vmatpush1.msra.mxu0 0.0
        %552 = vmatprep.subr.mxu0 0.0
        %553 = vmatpush1.msra.mxu0 0.0
        %554 = vmatprep.subr.mxu0 0.0
        %555 = vmatpush1.msra.mxu0 0.0
        %556 = vmatprep.subr.mxu0 0.0
        %557 = vmatpush1.msra.mxu0 0.0
        %558 = vmatprep.subr.mxu0 0.0
        %559 = vmatpush1.msra.mxu0 0.0
        %560 = vmatprep.subr.mxu0 %v536
        %561 = vmatpush1.msra.mxu0 %v533
        %562 = vmatprep.subr.mxu0 %v518
        %563 = vmatpush1.msra.mxu0 %v517
        %564 = vmatprep.subr.mxu0 %v516
        %565 = vmatpush1.msra.mxu0 %v515
        %566 = vmatprep.subr.mxu0 %v514
        %567 = vmatpush1.msra.mxu0 %v513
        %568 = vmatprep.subr.mxu0 %v512
        %569 = vmatpush1.msra.mxu0 %v511
        %570 = vmatprep.subr.mxu0 0.0
        %571 = vmatpush2.msra.mxu0 0.0
        %572 = vmatprep.subr.mxu0 0.0
        %573 = vmatpush2.msra.mxu0 0.0
        %574 = vmatprep.subr.mxu0 0.0
        %575 = vmatpush2.msra.mxu0 0.0
        %576 = vmatprep.subr.mxu0 0.0
        %577 = vmatpush2.msra.mxu0 0.0
        %578 = vmatprep.subr.mxu0 0.0
        %579 = vmatpush2.msra.mxu0 0.0
        %580 = vmatprep.subr.mxu0 0.0
        %581 = vmatpush2.msra.mxu0 0.0
        %582 = vmatprep.subr.mxu0 0.0
        %583 = vmatpush2.msra.mxu0 0.0
        %584 = vmatprep.subr.mxu0 0.0
        %585 = vmatpush2.msra.mxu0 0.0
        %586 = vmatprep.subr.mxu0 0.0
        %587 = vmatpush2.msra.mxu0 0.0
        %588 = vmatprep.subr.mxu0 0.0
        %589 = vmatpush2.msra.mxu0 0.0
        %590 = vmatprep.subr.mxu0 0.0
        %591 = vmatpush2.msra.mxu0 0.0
        %592 = vmatprep.subr.mxu0 0.0
        %593 = vmatpush2.msra.mxu0 0.0
        %594 = vmatprep.subr.mxu0 0.0
        %595 = vmatpush2.msra.mxu0 0.0
        %596 = vmatprep.subr.mxu0 0.0
        %597 = vmatpush2.msra.mxu0 0.0
        %598 = vmatprep.subr.mxu0 0.0
        %599 = vmatpush2.msra.mxu0 0.0
        %600 = vmatprep.subr.mxu0 0.0
        %601 = vmatpush2.msra.mxu0 0.0
        %602 = vmatprep.mubr.f32.mxu0 0.0
        %603 = vmatmul.mubr.f32.gmra.mxu0 %v529
        %v604 = vpop.f32.mrf.mxu0
        %v605 = vadd.f32 %v525, %v604
        %v606 = vpop.f32.mrf.mxu0
        %v607 = vadd.f32 %v525, %v606
        %608 = vdwg.mxu0
        %vm609 = vcmp.gt.f32.partialorder %v605, 0.0
        %vm610 = vcmp.gt.f32.partialorder %v607, 0.0
        %v611 = vmul.f32 %v605, 0.01
        %v612 = vmul.f32 %v607, 0.01
        %v613 = vsel %vm609, %v605, %v611
        %v614 = vsel %vm610, %v607, %v612
        %v617 = vcombine.low %v613, %v614
        %619 = vst [vmem:[#allocation2 + $0x4] sm:$0xff] %v617
        %v620 = vld [vmem:[#allocation2] sm:$0xff]
        %v621 = vld [vmem:[#allocation2 + $0x8] sm:$0xf]
        %v622 = vmul.f32 %v620, %v304
        %v623 = vmul.f32 %v621, %v302
        %v626 = vcombine.high %v622, %v622
        %627 = vrot.lane.b32.xlu0 %v622, 17
        %v628 = vpop.permute.xlu0 %627
        %629 = vrot.lane.b32.xlu0 %v626, 17
        %v630 = vpop.permute.xlu0 %629
        %631 = vrot.lane.b32.xlu0 %v623, 17
        %v632 = vpop.permute.xlu0 %631
        %v633 = vsel %vm318, %v628, %v630
        %v634 = vsel %vm318, %v630, %v632
        %637 = vst [vmem:[#allocation3] sm:$0xf] %v633
        %638 = vst [vmem:[#allocation3 + $0x8] sm:$0xf] %v634
        %v639 = vld [vmem:[#allocation2] sm:$0xff]
        %v640 = vld [vmem:[#allocation2 + $0x8] sm:$0xf]
        %v643 = vcombine.low %v639, %v639
        %v644 = vcombine.low %v640, %v640
        %645 = vrot.lane.b32.xlu0 %v643, 16
        %v646 = vpop.permute.xlu0 %645
        %647 = vrot.lane.b32.xlu0 %v639, 16
        %v648 = vpop.permute.xlu0 %647
        %649 = vrot.lane.b32.xlu0 %v644, 16
        %v650 = vpop.permute.xlu0 %649
        %v651 = vsel %vm337, %v646, %v648
        %v652 = vsel %vm337, %v648, %v650
        %655 = vst [vmem:[#allocation3] sm:$0xf0] %v651
        %656 = vst [vmem:[#allocation3 + $0x8] sm:$0xf0] %v652
        %v657 = vld [vmem:[#allocation2] sm:$0xff]
        %v658 = vld [vmem:[#allocation2 + $0x8] sm:$0xf]
        %v659 = vmul.f32 %v657, %v360
        %v660 = vmul.f32 %v658, %v358
        %v663 = vcombine.high %v659, %v659
        %664 = vrot.lane.b32.xlu0 %v659, 15
        %v665 = vpop.permute.xlu0 %664
        %666 = vrot.lane.b32.xlu0 %v663, 15
        %v667 = vpop.permute.xlu0 %666
        %668 = vrot.lane.b32.xlu0 %v660, 15
        %v669 = vpop.permute.xlu0 %668
        %v670 = vsel %vm374, %v665, %v667
        %v671 = vsel %vm374, %v667, %v669
        %674 = vst [vmem:[#allocation3 + $0x10] sm:$0xf] %v670
        %675 = vst [vmem:[#allocation3 + $0x18] sm:$0xf] %v671
        %v676 = vld [vmem:[#allocation2] sm:$0xff]
        %v677 = vld [vmem:[#allocation2 + $0x8] sm:$0xf]
        %v678 = vmul.f32 %v676, %v387
        %v679 = vmul.f32 %v677, %v385
        %v682 = vcombine.low %v678, %v678
        %v683 = vcombine.low %v679, %v679
        %684 = vrot.lane.b32.xlu0 %v682, 1
        %v685 = vpop.permute.xlu0 %684
        %686 = vrot.lane.b32.xlu0 %v678, 1
        %v687 = vpop.permute.xlu0 %686
        %688 = vrot.lane.b32.xlu0 %v683, 1
        %v689 = vpop.permute.xlu0 %688
        %v690 = vsel %vm402, %v685, %v687
        %v691 = vsel %vm402, %v687, %v689
        %694 = vst [vmem:[#allocation3 + $0x10] sm:$0xf0] %v690
        %695 = vst [vmem:[#allocation3 + $0x18] sm:$0xf0] %v691
        %v696 = vld [vmem:[#allocation2 + $0x4] sm:$0xff]
        %v698 = vcombine.high %v696, %v696
        %700 = vst [vmem:[#allocation3 + $0x20] sm:$0xf] %v696
        %701 = vst [vmem:[#allocation3 + $0x28] sm:$0xf] %v698
        %v702 = vld [vmem:[#allocation2 + $0x4] sm:$0xff]
        %v703 = vld [vmem:[#allocation2 + $0xc] sm:$0xf]
        %v704 = vmul.f32 %v702, %v420
        %v705 = vmul.f32 %v703, %v419
        %v708 = vcombine.low %v704, %v704
        %v709 = vcombine.low %v705, %v705
        %710 = vrot.lane.b32.xlu0 %v708, 127
        %v711 = vpop.permute.xlu0 %710
        %712 = vrot.lane.b32.xlu0 %v704, 127
        %v713 = vpop.permute.xlu0 %712
        %714 = vrot.lane.b32.xlu0 %v709, 127
        %v715 = vpop.permute.xlu0 %714
        %v716 = vsel %vm386, %v711, %v713
        %v717 = vsel %vm386, %v713, %v715
        %720 = vst [vmem:[#allocation3 + $0x20] sm:$0xf0] %v716
        %721 = vst [vmem:[#allocation3 + $0x28] sm:$0xf0] %v717
        %v722 = vld [vmem:[#allocation2 + $0x4] sm:$0xff]
        %v723 = vld [vmem:[#allocation2 + $0xc] sm:$0xf]
        %v724 = vmul.f32 %v722, %v446
        %v725 = vmul.f32 %v723, %v445
        %v728 = vcombine.high %v724, %v724
        %729 = vrot.lane.b32.xlu0 %v724, 113
        %v730 = vpop.permute.xlu0 %729
        %731 = vrot.lane.b32.xlu0 %v728, 113
        %v732 = vpop.permute.xlu0 %731
        %733 = vrot.lane.b32.xlu0 %v725, 113
        %v734 = vpop.permute.xlu0 %733
        %v735 = vsel %vm359, %v730, %v732
        %v736 = vsel %vm359, %v732, %v734
        %739 = vst [vmem:[#allocation3 + $0x30] sm:$0xf] %v735
        %740 = vst [vmem:[#allocation3 + $0x38] sm:$0xf] %v736
        %v741 = vld [vmem:[#allocation2 + $0x4] sm:$0xff]
        %v742 = vld [vmem:[#allocation2 + $0xc] sm:$0xf]
        %v745 = vcombine.low %v741, %v741
        %v746 = vcombine.low %v742, %v742
        %747 = vrot.lane.b32.xlu0 %v745, 112
        %v748 = vpop.permute.xlu0 %747
        %749 = vrot.lane.b32.xlu0 %v741, 112
        %v750 = vpop.permute.xlu0 %749
        %751 = vrot.lane.b32.xlu0 %v746, 112
        %v752 = vpop.permute.xlu0 %751
        %v753 = vsel %vm478, %v748, %v750
        %v754 = vsel %vm478, %v750, %v752
        %757 = vst [vmem:[#allocation3 + $0x30] sm:$0xf0] %v753
        %758 = vst [vmem:[#allocation3 + $0x38] sm:$0xf0] %v754
        %v759 = vld [vmem:[#allocation2 + $0x4] sm:$0xff]
        %v760 = vld [vmem:[#allocation2 + $0xc] sm:$0xf]
        %v761 = vmul.f32 %v759, %v490
        %v762 = vmul.f32 %v760, %v489
        %v765 = vcombine.high %v761, %v761
        %766 = vrot.lane.b32.xlu0 %v761, 111
        %v767 = vpop.permute.xlu0 %766
        %768 = vrot.lane.b32.xlu0 %v765, 111
        %v769 = vpop.permute.xlu0 %768
        %770 = vrot.lane.b32.xlu0 %v762, 111
        %v771 = vpop.permute.xlu0 %770
        %v772 = vsel %vm303, %v767, %v769
        %v773 = vsel %vm303, %v769, %v771
        %776 = vst [vmem:[#allocation3 + $0x40] sm:$0xf] %v772
        %777 = vst [vmem:[#allocation3 + $0x48] sm:$0xf] %v773
        %v778 = vld [vmem:[%s3] sm:$0xff]
        %v779 = vld [vmem:[#allocation3] sm:$0xff]
        %v780 = vld [vmem:[#allocation3 + $0x8] sm:$0xff]
        %v781 = vld [vmem:[#allocation3 + $0x10] sm:$0xff]
        %v782 = vld [vmem:[#allocation3 + $0x18] sm:$0xff]
        %v783 = vld [vmem:[#allocation3 + $0x20] sm:$0xff]
        %v784 = vld [vmem:[#allocation3 + $0x28] sm:$0xff]
        %v785 = vld [vmem:[#allocation3 + $0x30] sm:$0xff]
        %v786 = vld [vmem:[#allocation3 + $0x38] sm:$0xff]
        %v787 = vld [vmem:[#allocation3 + $0x40] sm:$0xf]
        %v788 = vld [vmem:[#allocation3 + $0x48] sm:$0xf]
        %v789 = vld [vmem:[%s4] sm:$0xff]
        %791 = vset.pattern.permute.xlu0 0
        %792 = vperm.xlu0 %791, %v789
        %v793 = vpop.permute.xlu0 %792
        %v796 = vsel %vm527, %v778, 0
        %v799 = vsel %vm531, %v787, 0
        %v802 = vsel %vm531, %v788, 0
        %804 = vmatprep.subr.mxu0 0.0
        %805 = vmatpush1.msra.mxu0 0.0
        %806 = vmatprep.subr.mxu0 0.0
        %807 = vmatpush1.msra.mxu0 0.0
        %808 = vmatprep.subr.mxu0 0.0
        %809 = vmatpush1.msra.mxu0 0.0
        %810 = vmatprep.subr.mxu0 0.0
        %811 = vmatpush1.msra.mxu0 0.0
        %812 = vmatprep.subr.mxu0 0.0
        %813 = vmatpush1.msra.mxu0 0.0
        %814 = vmatprep.subr.mxu0 0.0
        %815 = vmatpush1.msra.mxu0 0.0
        %816 = vmatprep.subr.mxu0 0.0
        %817 = vmatpush1.msra.mxu0 0.0
        %818 = vmatprep.subr.mxu0 0.0
        %819 = vmatpush1.msra.mxu0 0.0
        %820 = vmatprep.subr.mxu0 0.0
        %821 = vmatpush1.msra.mxu0 0.0
        %822 = vmatprep.subr.mxu0 0.0
        %823 = vmatpush1.msra.mxu0 0.0
        %824 = vmatprep.subr.mxu0 0.0
        %825 = vmatpush1.msra.mxu0 0.0
        %826 = vmatprep.subr.mxu0 %v802
        %827 = vmatpush1.msra.mxu0 %v799
        %828 = vmatprep.subr.mxu0 %v786
        %829 = vmatpush1.msra.mxu0 %v785
        %830 = vmatprep.subr.mxu0 %v784
        %831 = vmatpush1.msra.mxu0 %v783
        %832 = vmatprep.subr.mxu0 %v782
        %833 = vmatpush1.msra.mxu0 %v781
        %834 = vmatprep.subr.mxu0 %v780
        %835 = vmatpush1.msra.mxu0 %v779
        %836 = vmatprep.subr.mxu0 0.0
        %837 = vmatpush2.msra.mxu0 0.0
        %838 = vmatprep.subr.mxu0 0.0
        %839 = vmatpush2.msra.mxu0 0.0
        %840 = vmatprep.subr.mxu0 0.0
        %841 = vmatpush2.msra.mxu0 0.0
        %842 = vmatprep.subr.mxu0 0.0
        %843 = vmatpush2.msra.mxu0 0.0
        %844 = vmatprep.subr.mxu0 0.0
        %845 = vmatpush2.msra.mxu0 0.0
        %846 = vmatprep.subr.mxu0 0.0
        %847 = vmatpush2.msra.mxu0 0.0
        %848 = vmatprep.subr.mxu0 0.0
        %849 = vmatpush2.msra.mxu0 0.0
        %850 = vmatprep.subr.mxu0 0.0
        %851 = vmatpush2.msra.mxu0 0.0
        %852 = vmatprep.subr.mxu0 0.0
        %853 = vmatpush2.msra.mxu0 0.0
        %854 = vmatprep.subr.mxu0 0.0
        %855 = vmatpush2.msra.mxu0 0.0
        %856 = vmatprep.subr.mxu0 0.0
        %857 = vmatpush2.msra.mxu0 0.0
        %858 = vmatprep.subr.mxu0 0.0
        %859 = vmatpush2.msra.mxu0 0.0
        %860 = vmatprep.subr.mxu0 0.0
        %861 = vmatpush2.msra.mxu0 0.0
        %862 = vmatprep.subr.mxu0 0.0
        %863 = vmatpush2.msra.mxu0 0.0
        %864 = vmatprep.subr.mxu0 0.0
        %865 = vmatpush2.msra.mxu0 0.0
        %866 = vmatprep.subr.mxu0 0.0
        %867 = vmatpush2.msra.mxu0 0.0
        %868 = vmatprep.mubr.f32.mxu0 0.0
        %869 = vmatmul.mubr.f32.gmra.mxu0 %v796
        %v870 = vpop.f32.mrf.mxu0
        %v871 = vadd.f32 %v793, %v870
        %v872 = vpop.f32.mrf.mxu0
        %v873 = vadd.f32 %v793, %v872
        %874 = vdwg.mxu0
        %875 = vst [vmem:[%s280] sm:$0xff] %v871
        %876 = vst [vmem:[%s280 + $0x8] sm:$0xff] %v873
        %s877 = sand.u32 %s163, 1
        %s878 = scalar_lea.sflag [#allocation6], %s877
        %s879 = sand.u32 %s163, 1
        %s880 = smul.addr %s879, 16
        %s881 = scalar_lea.vmem [#allocation9], %s880
        // Predicated region
        $region53: #{tpu_custom_call.1} parent=43 // pred_check
          %p882 = pneg %p173
        $region54: #{tpu_custom_call.1} parent=43 // pred_check_branch
          %884 = sbr.rel (%p882) target = $region56
        $region55: #{tpu_custom_call.1} parent=43 // pred_region
          %s886 = ssub.s32 256, 256
          %887 = vsyncadd %s878, %s886
          %s888 = smul.addr %s24, 2
          %s889 = smul.addr %s888, 128
          %s890 = scalar_lea.hbm %s6, %s889
          %s892 = sshll.u32 %s881, 4
          %s893 = int_to_ptr.vmem [resolvable:$true] %s892
          %895 = dma.vmem_to_hbm [thread:$0]  %s893, 256, %s890, %s878
        $region56: #{tpu_custom_call.1} parent=43 // pred_fallthru
          _
      $region44: #{tpu_custom_call.1} parent=5 // pred_fallthru
        _
      %p896 = scmp.le.s32.totalorder 2, %s19
      // Predicated region
      $region57: #{tpu_custom_call.1} parent=5 // pred_check
        %p897 = pneg %p896
      $region58: #{tpu_custom_call.1} parent=5 // pred_check_branch
        %899 = sbr.rel (%p897) target = $region60
      $region59: #{tpu_custom_call.1} parent=5 // pred_region
        %s900 = ssub.s32 %s19, 2
        // Predicated region
        $region61: #{tpu_custom_call.1} parent=59 // pred_check
          %p901 = pneg %p179
        $region62: #{tpu_custom_call.1} parent=59 // pred_check_branch
          %903 = sbr.rel (%p901) target = $region64
        $region63: #{tpu_custom_call.1} parent=59 // pred_region
          %s904 = sand.u32 %s164, 1
          %s905 = scalar_lea.sflag [#allocation6], %s904
          %s906 = sand.u32 %s164, 1
          %s907 = smul.addr %s906, 16
          %s908 = scalar_lea.vmem [#allocation9], %s907
          %909 = dma.done %s905, 256
        $region64: #{tpu_custom_call.1} parent=59 // pred_fallthru
          _
      $region60: #{tpu_custom_call.1} parent=5 // pred_fallthru
        _
    $region6: #{tpu_custom_call.1} parent=1 // loop_footer
      %s23 = sadd.s32 1, %s19
    $region7: #{tpu_custom_call.1} parent=1 // loop_footer_branch
      %18 = sbr.rel target = $region3
    $region8: #{tpu_custom_call.1} parent=1 // loop_exit
      _
    %910 = vsyncpa [#allocation5], 1
    %s911 = scalar_lea.sflag [#allocation5], 1
    %912 = vsyncpa %s911, 1
    %913 = vsyncpa [#allocation8], 1
    %914 = vsyncpa [#allocation6], 1
    %s915 = scalar_lea.sflag [#allocation6], 1
    %916 = vsyncpa %s915, 1

</llo_original>
